<compile_context>
chip_gen: v6e
topology: v6e:2x2x1
jax: 0.10.0
libtpu: 0.0.40
codegen_flags: <defaults>
</compile_context>

<pallas_src>
import jax
import jax.numpy as jnp
from jax import lax
from jax.experimental import pallas as pl
from jax.experimental.pallas import tpu as pltpu


_VMEM_LIMIT = 48 * 1024 * 1024  # headroom below v7x's 64 MiB / TC physical VMEM


def _pick_hw_tile(hw, candidates=(2048, 1024, 512, 256, 128)):
    """Largest 128-multiple tile that divides HW; fall back to the full extent."""
    for t in candidates:
        if hw % t == 0:
            return t
    return hw  # full-dim block is always legal (no 128 constraint when == array dim)


def _pick_channel_group(c3):
    """Channel-group size for the depthwise conv (gives a 2nd parallel grid axis)."""
    for g in (32, 24, 16, 12, 8, 6, 4, 3, 2, 1):
        if c3 % g == 0 and c3 // g >= 2:
            return g
    return c3


# ---------------------------------------------------------------------------
# Kernel 1: 1x1 convolution == per-batch (Cout,Cin) @ (Cin,HW_tile) matmul
# ---------------------------------------------------------------------------
def _conv1x1_kernel(x_ref, w_ref, b_ref, o_ref):
    # x: (Cin, T)  w: (Cout, Cin)  b: (Cout, 1)  o: (Cout, T)
    acc = jnp.dot(w_ref[...], x_ref[...], preferred_element_type=jnp.float32)
    o_ref[...] = (acc + b_ref[...]).astype(o_ref.dtype)


def conv1x1(x_cf, w, b):
    # x_cf: (B, Cin, HW) channels-first -> (B, Cout, HW)
    bsz, cin, hw = x_cf.shape
    cout = w.shape[0]
    t = _pick_hw_tile(hw)
    return pl.pallas_call(
        _conv1x1_kernel,
        out_shape=jax.ShapeDtypeStruct((bsz, cout, hw), x_cf.dtype),
        grid=(bsz, hw // t),
        in_specs=[
            pl.BlockSpec((None, cin, t), lambda i, j: (i, 0, j)),
            pl.BlockSpec((cout, cin), lambda i, j: (0, 0)),   # resident weight
            pl.BlockSpec((cout, 1), lambda i, j: (0, 0)),     # resident bias
        ],
        out_specs=pl.BlockSpec((None, cout, t), lambda i, j: (i, 0, j)),
        compiler_params=pltpu.CompilerParams(
            dimension_semantics=("parallel", "parallel"),
            vmem_limit_bytes=_VMEM_LIMIT,
        ),
    )(x_cf, w, b)


# ---------------------------------------------------------------------------
# Kernel 2: depthwise 3x3 conv (padding=1), channels-first, channel-group tiled
# ---------------------------------------------------------------------------
def _dwconv3x3_kernel(x_ref, w_ref, b_ref, o_ref):
    # x: (CG, H+2, W+2)  w: (CG, 3, 3)  b: (CG, 1, 1)  o: (CG, H, W)
    cg, h, w = o_ref.shape
    acc = jnp.zeros((cg, h, w), jnp.float32)
    for di in range(3):
        for dj in range(3):
            tap = x_ref[:, di:di + h, dj:dj + w].astype(jnp.float32)
            wt = w_ref[:, di:di + 1, dj:dj + 1].astype(jnp.float32)   # (CG,1,1)
            acc = acc + tap * wt
    o_ref[...] = (acc + b_ref[...].astype(jnp.float32)).astype(o_ref.dtype)


def dwconv3x3(x_pad, w_dw, b_dw, out_h, out_w):
    # x_pad: (B, C3, H+2, W+2), w_dw: (C3, 3, 3), b_dw: (C3, 1, 1) -> (B, C3, H, W)
    bsz, c3, hp, wp = x_pad.shape
    cg = _pick_channel_group(c3)
    return pl.pallas_call(
        _dwconv3x3_kernel,
        out_shape=jax.ShapeDtypeStruct((bsz, c3, out_h, out_w), x_pad.dtype),
        grid=(bsz, c3 // cg),
        in_specs=[
            pl.BlockSpec((None, cg, hp, wp), lambda i, g: (i, g, 0, 0)),
            pl.BlockSpec((cg, 3, 3), lambda i, g: (g, 0, 0)),
            pl.BlockSpec((cg, 1, 1), lambda i, g: (g, 0, 0)),
        ],
        out_specs=pl.BlockSpec((None, cg, out_h, out_w), lambda i, g: (i, g, 0, 0)),
        compiler_params=pltpu.CompilerParams(
            dimension_semantics=("parallel", "parallel"),
            vmem_limit_bytes=_VMEM_LIMIT,
        ),
    )(x_pad, w_dw, b_dw)


# ---------------------------------------------------------------------------
# Kernel 3a: streaming Gram + masked per-head softmax -> P (B, C, C)
#   gram/norms accumulate over HW tiles; L2 normalization folded into the
#   (C,C) result via an outer-product scale; block-diagonal mask + softmax.
# ---------------------------------------------------------------------------
def _gram_softmax_kernel(q_ref, k_ref, trow_ref, mask_ref, p_ref,
                         gram_acc, qsq_acc, ksq_acc):
    t = pl.program_id(1)

    @pl.when(t == 0)
    def _():
        gram_acc[...] = jnp.zeros_like(gram_acc)
        qsq_acc[...] = jnp.zeros_like(qsq_acc)
        ksq_acc[...] = jnp.zeros_like(ksq_acc)

    q = q_ref[...].astype(jnp.float32)            # (C, T)
    k = k_ref[...].astype(jnp.float32)            # (C, T)
    gram_acc[...] += lax.dot_general(q, k, (((1,), (1,)), ((), ())),
                                     preferred_element_type=jnp.float32)  # (C, C)
    qsq_acc[...] += jnp.sum(q * q, axis=1, keepdims=True)                 # (C, 1)
    ksq_acc[...] += jnp.sum(k * k, axis=1, keepdims=True)                 # (C, 1)

    @pl.when(t == pl.num_programs(1) - 1)
    def _():
        # torch.nn.functional.normalize eps: q / max(||q||, 1e-12)
        rq = 1.0 / jnp.maximum(jnp.sqrt(qsq_acc[...]), 1e-12)            # (C, 1)
        rk = 1.0 / jnp.maximum(jnp.sqrt(ksq_acc[...]), 1e-12)            # (C, 1)
        # outer product: scale[i, j] = rq[i] * temp_row[i] * rk[j]
        scale = lax.dot_general(rq * trow_ref[...], rk,
                                (((1,), (1,)), ((), ())),
                                preferred_element_type=jnp.float32)       # (C, C)
        a = gram_acc[...] * scale + mask_ref[...]   # additive -1e30 off-head-block
        a = a - jnp.max(a, axis=-1, keepdims=True)
        e = jnp.exp(a)
        # exact reciprocal: operand is only (C,1), EUP approx buys nothing here
        p = e * pl.reciprocal(jnp.sum(e, axis=-1, keepdims=True), approx=False)
        p_ref[...] = p.astype(p_ref.dtype)


def gram_softmax(qkv_cf, temp_rows, mask, c):
    # qkv_cf: (B, 3C, HW); q = channel block 0, k = channel block 1.
    bsz, _, hw = qkv_cf.shape
    t = _pick_hw_tile(hw)
    return pl.pallas_call(
        _gram_softmax_kernel,
        out_shape=jax.ShapeDtypeStruct((bsz, c, c), jnp.float32),
        grid=(bsz, hw // t),
        in_specs=[
            pl.BlockSpec((None, c, t), lambda i, j: (i, 0, j)),   # q
            pl.BlockSpec((None, c, t), lambda i, j: (i, 1, j)),   # k
            pl.BlockSpec((c, 1), lambda i, j: (0, 0)),            # temp per row
            pl.BlockSpec((c, c), lambda i, j: (0, 0)),            # block-diag mask
        ],
        out_specs=pl.BlockSpec((None, c, c), lambda i, j: (i, 0, 0)),
        scratch_shapes=[
            pltpu.VMEM((c, c), jnp.float32),
            pltpu.VMEM((c, 1), jnp.float32),
            pltpu.VMEM((c, 1), jnp.float32),
        ],
        compiler_params=pltpu.CompilerParams(
            dimension_semantics=("parallel", "arbitrary"),
            vmem_limit_bytes=_VMEM_LIMIT,
        ),
    )(qkv_cf, qkv_cf, temp_rows, mask)


# ---------------------------------------------------------------------------
# Kernel 3b: out_tile = (W_proj @ P) @ v_tile + b_proj  (attn@v fused w/ proj)
# ---------------------------------------------------------------------------
def _apply_proj_kernel(p_ref, v_ref, wp_ref, bp_ref, o_ref):
    # p: (C, C)  v: (C, T)  wp: (C, C)  bp: (C, 1)  o: (C, T)
    m = jnp.dot(wp_ref[...].astype(jnp.float32), p_ref[...].astype(jnp.float32),
                preferred_element_type=jnp.float32)                       # (C, C)
    out = jnp.dot(m, v_ref[...].astype(jnp.float32),
                  preferred_element_type=jnp.float32)                     # (C, T)
    o_ref[...] = (out + bp_ref[...]).astype(o_ref.dtype)


def apply_proj(p_full, qkv_cf, w_proj, b_proj, c):
    bsz, _, hw = qkv_cf.shape
    t = _pick_hw_tile(hw)
    return pl.pallas_call(
        _apply_proj_kernel,
        out_shape=jax.ShapeDtypeStruct((bsz, c, hw), qkv_cf.dtype),
        grid=(bsz, hw // t),
        in_specs=[
            pl.BlockSpec((None, c, c), lambda i, j: (i, 0, 0)),   # P (per batch)
            pl.BlockSpec((None, c, t), lambda i, j: (i, 2, j)),   # v = channel block 2
            pl.BlockSpec((c, c), lambda i, j: (0, 0)),            # resident W_proj
            pl.BlockSpec((c, 1), lambda i, j: (0, 0)),            # resident bias
        ],
        out_specs=pl.BlockSpec((None, c, t), lambda i, j: (i, 0, j)),
        compiler_params=pltpu.CompilerParams(
            dimension_semantics=("parallel", "parallel"),
            vmem_limit_bytes=_VMEM_LIMIT,
        ),
    )(p_full, qkv_cf, w_proj, b_proj)


# ---------------------------------------------------------------------------
# Full forward pass (host glue = reshapes + 1-pixel zero pad; no transposes)
# ---------------------------------------------------------------------------
def attention_forward(x, params, num_heads):
    b, c, h, w = x.shape
    hw = h * w
    c3 = 3 * c
    ch = c // num_heads
    assert c % num_heads == 0
    # Note: per-head channel blocking along the sublane axis requires c % 8 == 0
    # (true for Restormer dims); otherwise pad channels on the host.

    x_cf = x.reshape(b, c, hw)                                   # free reshape

    # qkv 1x1 conv
    w_qkv = params["w_qkv"][:, :, 0, 0]                          # (3c, c)
    b_qkv = params["b_qkv"].reshape(c3, 1)
    qkv = conv1x1(x_cf, w_qkv, b_qkv)                            # (b, 3c, hw)

    # depthwise 3x3 conv (1-pixel zero pad on host, 9 taps inside the kernel)
    qkv_pad = jnp.pad(qkv.reshape(b, c3, h, w),
                      ((0, 0), (0, 0), (1, 1), (1, 1)))
    w_dw = params["w_dw"].reshape(c3, 3, 3)
    b_dw = params["b_dw"].reshape(c3, 1, 1)
    qkv_dw = dwconv3x3(qkv_pad, w_dw, b_dw, h, w).reshape(b, c3, hw)

    # attention: streaming Gram + masked softmax -> P, then (W_proj @ P) @ v
    temp_rows = jnp.repeat(params["temp"].reshape(num_heads), ch).reshape(c, 1)
    temp_rows = temp_rows.astype(jnp.float32)
    head_idx = jnp.arange(c) // ch
    mask = jnp.where(head_idx[:, None] == head_idx[None, :], 0.0, -1e30)
    mask = mask.astype(jnp.float32)

    p_full = gram_softmax(qkv_dw, temp_rows, mask, c)            # (b, c, c)

    w_proj = params["w_proj"][:, :, 0, 0]                        # (c, c)
    b_proj = params["b_proj"].reshape(c, 1)
    out = apply_proj(p_full, qkv_dw, w_proj, b_proj, c)          # (b, c, hw)

    return out.reshape(b, c, h, w)                               # free reshape


# ---------------------------------------------------------------------------
# Pure-JAX reference (mirrors the PyTorch forward) for correctness checking
# ---------------------------------------------------------------------------
def reference_forward(x, params, num_heads):
    b, c, h, w = x.shape
    dn = ("NCHW", "OIHW", "NCHW")
    qkv = lax.conv_general_dilated(
        x, params["w_qkv"], (1, 1), "VALID", dimension_numbers=dn
    ) + params["b_qkv"][None, :, None, None]
    qkv = lax.conv_general_dilated(
        qkv, params["w_dw"], (1, 1), ((1, 1), (1, 1)),
        dimension_numbers=dn, feature_group_count=3 * c,
    ) + params["b_dw"][None, :, None, None]
    q, k, v = jnp.split(qkv, 3, axis=1)

    def heads(t):
        return t.reshape(b, num_heads, c // num_heads, h * w)

    def l2n(t):
        n = jnp.sqrt(jnp.sum(t * t, axis=-1, keepdims=True))
        return t / jnp.maximum(n, 1e-12)

    q, k, v = heads(q), heads(k), heads(v)
    q, k = l2n(q), l2n(k)
    attn = jnp.einsum("bhcd,bhkd->bhck", q, k) * params["temp"][None]
    attn = jax.nn.softmax(attn, axis=-1)
    out = jnp.einsum("bhck,bhkd->bhcd", attn, v)
    out = out.reshape(b, c, h, w)
    out = lax.conv_general_dilated(
        out, params["w_proj"], (1, 1), "VALID", dimension_numbers=dn
    ) + params["b_proj"][None, :, None, None]
    return out


if __name__ == "__main__":
    dim, num_heads = 8, 2          # dim divisible by num_heads (and by 8)
    b, h, w = 2, 16, 16            # small spatial size

    key = jax.random.PRNGKey(0)
    keys = jax.random.split(key, 8)
    # Deterministic synthetic parameters (shapes follow the PyTorch __init__, bias=True)
    params = {
        "temp":   jax.random.uniform(keys[0], (num_heads, 1, 1), jnp.float32, 0.5, 1.5),
        "w_qkv":  0.2 * jax.random.normal(keys[1], (3 * dim, dim, 1, 1), jnp.float32),
        "b_qkv":  0.1 * jax.random.normal(keys[2], (3 * dim,), jnp.float32),
        "w_dw":   0.2 * jax.random.normal(keys[3], (3 * dim, 1, 3, 3), jnp.float32),
        "b_dw":   0.1 * jax.random.normal(keys[4], (3 * dim,), jnp.float32),
        "w_proj": 0.2 * jax.random.normal(keys[5], (dim, dim, 1, 1), jnp.float32),
        "b_proj": 0.1 * jax.random.normal(keys[6], (dim,), jnp.float32),
    }
    x = jax.random.normal(keys[7], (b, dim, h, w), jnp.float32)

    out = attention_forward(x, params, num_heads)
    out = jax.block_until_ready(out)

    ref = reference_forward(x, params, num_heads)
    assert out.shape == (b, dim, h, w), out.shape
    max_err = float(jnp.max(jnp.abs(out - ref)))
    assert jnp.allclose(out, ref, atol=1e-4, rtol=1e-4), f"max_err={max_err}"

    print("KERNEL_OK")
</pallas_src>

<mosaic_0001>
module attributes {stable_mosaic.version = 11 : i64} {
  func.func @_conv1x1_kernel(%arg0: i32, %arg1: i32, %arg2: memref<1x8x256xf32, #tpu.memory_space<vmem>>, %arg3: memref<24x8xf32, #tpu.memory_space<vmem>>, %arg4: memref<24x1xf32, #tpu.memory_space<vmem>>, %arg5: memref<1x24x256xf32, #tpu.memory_space<vmem>>) attributes {dimension_semantics = [#tpu.dimension_semantics<parallel>, #tpu.dimension_semantics<parallel>], iteration_bounds = array<i64: 2, 1>, scalar_prefetch = 0 : i64, scratch_operands = 0 : i64, tpu.core_type = #tpu.core_type<tc>, window_params = [{transform_indices = @transform_0, window_bounds = array<i64: 1, 8, 256>}, {pipeline_mode = #tpu.pipeline_mode<synchronous>, transform_indices = @transform_1, window_bounds = array<i64: 24, 8>}, {pipeline_mode = #tpu.pipeline_mode<synchronous>, transform_indices = @transform_2, window_bounds = array<i64: 24, 1>}, {transform_indices = @transform_3, window_bounds = array<i64: 1, 24, 256>}]} {
    %c0 = arith.constant 0 : index
    %c0_0 = arith.constant 0 : index
    %0 = vector.load %arg3[%c0, %c0_0] : memref<24x8xf32, #tpu.memory_space<vmem>>, vector<24x8xf32>
    %c0_1 = arith.constant 0 : index
    %c0_2 = arith.constant 0 : index
    %c0_3 = arith.constant 0 : index
    %1 = vector.load %arg2[%c0_1, %c0_2, %c0_3] : memref<1x8x256xf32, #tpu.memory_space<vmem>>, vector<1x8x256xf32>
    %2 = vector.shape_cast %1 : vector<1x8x256xf32> to vector<8x256xf32>
    %cst = arith.constant dense<0.000000e+00> : vector<24x256xf32>
    %3 = tpu.matmul %0, %2, %cst {dimension_numbers = #tpu.dot_dimension_numbers<[1], [0], [0], [1], [0, 0, 1, 1], [], []>} : vector<24x8xf32>, vector<8x256xf32>, vector<24x256xf32> -> vector<24x256xf32>
    %c0_4 = arith.constant 0 : index
    %c0_5 = arith.constant 0 : index
    %4 = vector.load %arg4[%c0_4, %c0_5] : memref<24x1xf32, #tpu.memory_space<vmem>>, vector<24x1xf32>
    %5 = vector.broadcast %4 : vector<24x1xf32> to vector<24x256xf32>
    %6 = arith.addf %3, %5 : vector<24x256xf32>
    %c0_6 = arith.constant 0 : index
    %c0_7 = arith.constant 0 : index
    %c0_8 = arith.constant 0 : index
    %7 = vector.load %arg5[%c0_6, %c0_7, %c0_8] : memref<1x24x256xf32, #tpu.memory_space<vmem>>, vector<1x24x256xf32>
    %8 = vector.shape_cast %7 : vector<1x24x256xf32> to vector<24x256xf32>
    %9 = vector.shape_cast %6 : vector<24x256xf32> to vector<1x24x256xf32>
    tpu.vector_store %arg5[%c0_6, %c0_7, %c0_8], %9 {strides = array<i32>} : memref<1x24x256xf32, #tpu.memory_space<vmem>>, vector<1x24x256xf32>,
    return
  }
  func.func @transform_0(%arg0: i32, %arg1: i32) -> (i32, i32, i32) {
    %c0_i32 = arith.constant 0 : i32
    %c0_i32_0 = arith.constant 0 : i32
    return %arg0, %c0_i32, %arg1 : i32, i32, i32
  }
  func.func @transform_1(%arg0: i32, %arg1: i32) -> (i32, i32) {
    %c0_i32 = arith.constant 0 : i32
    %c0_i32_0 = arith.constant 0 : i32
    %c0_i32_1 = arith.constant 0 : i32
    return %c0_i32, %c0_i32_0 : i32, i32
  }
  func.func @transform_2(%arg0: i32, %arg1: i32) -> (i32, i32) {
    %c0_i32 = arith.constant 0 : i32
    %c0_i32_0 = arith.constant 0 : i32
    %c0_i32_1 = arith.constant 0 : i32
    return %c0_i32, %c0_i32_0 : i32, i32
  }
  func.func @transform_3(%arg0: i32, %arg1: i32) -> (i32, i32, i32) {
    %c0_i32 = arith.constant 0 : i32
    %c0_i32_0 = arith.constant 0 : i32
    return %arg0, %c0_i32, %arg1 : i32, i32, i32
  }
}

</mosaic_0001>

<llo_original>
// kernel: tpu_custom_call.1
$region0: #{tpu_custom_call.1}
  #allocation0 [shape = 'u32[]', space=smem, size = 0x4, offset = 0x4, fixed_abs, tag = 'smem constant byte address 0x4 - core index']
  #allocation1 [shape = 'u32[144,128]{1,0:T(1,128)}', space=vmem, size = 0x12000, scoped, tag = 'internal scratch']
  %s0 = inlined_call_operand.vmem [shape: f32[2,8,256], index: 0, kind: input, shape index: {}]
  %s1 = inlined_call_operand.vmem [shape: f32[24,8], index: 1, kind: input, shape index: {}]
  %s2 = inlined_call_operand.vmem [shape: f32[24,1], index: 2, kind: input, shape index: {}]
  %s3 = inlined_call_operand.hbm [shape: f32[2,24,256], index: 3, kind: output, shape index: {}]
  %s4 = sld [smem:[#allocation0]]
  $region45: #{tpu_custom_call.1} parent=0
    _
  %s6 = ssub.s32 1, %s4
  %s7 = scalar_select 0, %s6, %s4
  $region1: #{tpu_custom_call.1} parent=0
    #allocation2 [shape = 'u8[49152]{0}', space=vmem, size = 0xc000, scoped, tag = 'output window, operand 0']
    #allocation3 [shape = 's32[2]{0}', space=sflag, size = 0x8, scoped, tag = 'scoped memory for tpu_custom_call.1']
    %8 = vsyncpa [#allocation3], 0
    %s9 = scalar_lea.sflag [#allocation3], 1
    %10 = vsyncpa %s9, 0
    loop: start=0, step=1, limit=4
    $region2: #{tpu_custom_call.1} parent=1 // loop_pre_header
      _
    $region3: #{tpu_custom_call.1} parent=1 // loop_header
      %s12 = sphi 0, %s16
      %p13 = scmp.ge.s32.totalorder %s12, 4
      %s19 = sphi 0, %s31
      %s20 = sphi 0, %s27
      %s21 = sphi 0, %s19
      %s22 = sphi 0, %s20
      %s23 = sphi 0, %s21
      %s24 = sphi 0, %s22
      %s36 = sphi 0, %s38
      %s39 = sphi 0, %s36
      %s40 = sphi 0, %s39
      %s56 = sphi 0, %s40
      %s60 = sphi 0, %s60
      %s62 = sphi 0, %s60
      %s63 = sphi 0, %s62
      %s77 = sphi 0, %s63
      %s81 = sphi 0, %s81
      %s83 = sphi 0, %s81
      %s84 = sphi 0, %s83
      %s98 = sphi 0, %s84
      %s106 = sphi 0, %s108
      %s109 = sphi 0, %s106
      %s110 = sphi 0, %s109
      %s126 = sphi 0, %s110
    $region4: #{tpu_custom_call.1} parent=1 // loop_header_branch
      %15 = sbr.rel (%p13) target = $region8
    $region5: #{tpu_custom_call.1} parent=1 // loop_body
      %s17 = ssub.s32 %s12, 1
      %s18 = ssub.s32 %s12, 2
      %s25 = sadd.s32 1, %s20
      %p26 = scmp.ge.s32.totalorder %s25, 1
      %s27 = scalar_select %p26, 0, %s25
      %s28 = sadd.s32 1, %s19
      %s29 = scalar_select %p26, %s28, %s19
      %p30 = scmp.ge.s32.totalorder %s29, 2
      %s31 = scalar_select %p30, 0, %s29
      %s32 = ssub.s32 %s19, %s31
      %s33 = ssub.s32 %s20, %s27
      %s34 = sor.u32 %s32, %s33
      %p35 = scmp.eq.s32.totalorder %s34, 0
      %s37 = sadd.s32 %s36, 1
      %s38 = scalar_select %p35, %s36, %s37
      %p41 = pneg %p35
      %p42 = scmp.eq.s32.totalorder %s12, 1
      %p43 = por %p41, %p42
      %p44 = scmp.ne.s32.totalorder %s36, %s39
      %p45 = scmp.eq.s32.totalorder %s12, 0
      %p46 = por %p44, %p45
      %p47 = scmp.ne.s32.totalorder %s36, %s39
      %p48 = scmp.eq.s32.totalorder %s17, 1
      %p49 = por %p47, %p48
      %p50 = scmp.ne.s32.totalorder %s39, %s40
      %p51 = scmp.eq.s32.totalorder %s17, 0
      %p52 = por %p50, %p51
      %p53 = scmp.ne.s32.totalorder %s39, %s40
      %p54 = scmp.eq.s32.totalorder %s18, 1
      %p55 = por %p53, %p54
      %p57 = scmp.ne.s32.totalorder %s40, %s56
      %p58 = scmp.eq.s32.totalorder %s18, 0
      %p59 = por %p57, %p58
      %s61 = sadd.s32 %s60, 1
      %p64 = scmp.eq.s32.totalorder %s12, 1
      %p65 = scmp.ne.s32.totalorder %s60, %s62
      %p66 = scmp.eq.s32.totalorder %s12, 0
      %p67 = por %p65, %p66
      %p68 = scmp.ne.s32.totalorder %s60, %s62
      %p69 = scmp.eq.s32.totalorder %s17, 1
      %p70 = por %p68, %p69
      %p71 = scmp.ne.s32.totalorder %s62, %s63
      %p72 = scmp.eq.s32.totalorder %s17, 0
      %p73 = por %p71, %p72
      %p74 = scmp.ne.s32.totalorder %s62, %s63
      %p75 = scmp.eq.s32.totalorder %s18, 1
      %p76 = por %p74, %p75
      %p78 = scmp.ne.s32.totalorder %s63, %s77
      %p79 = scmp.eq.s32.totalorder %s18, 0
      %p80 = por %p78, %p79
      %s82 = sadd.s32 %s81, 1
      %p85 = scmp.eq.s32.totalorder %s12, 1
      %p86 = scmp.ne.s32.totalorder %s81, %s83
      %p87 = scmp.eq.s32.totalorder %s12, 0
      %p88 = por %p86, %p87
      %p89 = scmp.ne.s32.totalorder %s81, %s83
      %p90 = scmp.eq.s32.totalorder %s17, 1
      %p91 = por %p89, %p90
      %p92 = scmp.ne.s32.totalorder %s83, %s84
      %p93 = scmp.eq.s32.totalorder %s17, 0
      %p94 = por %p92, %p93
      %p95 = scmp.ne.s32.totalorder %s83, %s84
      %p96 = scmp.eq.s32.totalorder %s18, 1
      %p97 = por %p95, %p96
      %p99 = scmp.ne.s32.totalorder %s84, %s98
      %p100 = scmp.eq.s32.totalorder %s18, 0
      %p101 = por %p99, %p100
      %s102 = ssub.s32 %s19, %s31
      %s103 = ssub.s32 %s20, %s27
      %s104 = sor.u32 %s102, %s103
      %p105 = scmp.eq.s32.totalorder %s104, 0
      %s107 = sadd.s32 %s106, 1
      %s108 = scalar_select %p105, %s106, %s107
      %p111 = pneg %p105
      %p112 = scmp.eq.s32.totalorder %s12, 1
      %p113 = por %p111, %p112
      %p114 = scmp.ne.s32.totalorder %s106, %s109
      %p115 = scmp.eq.s32.totalorder %s12, 0
      %p116 = por %p114, %p115
      %p117 = scmp.ne.s32.totalorder %s106, %s109
      %p118 = scmp.eq.s32.totalorder %s17, 1
      %p119 = por %p117, %p118
      %p120 = scmp.ne.s32.totalorder %s109, %s110
      %p121 = scmp.eq.s32.totalorder %s17, 0
      %p122 = por %p120, %p121
      %p123 = scmp.ne.s32.totalorder %s109, %s110
      %p124 = scmp.eq.s32.totalorder %s18, 1
      %p125 = por %p123, %p124
      %p127 = scmp.ne.s32.totalorder %s110, %s126
      %p128 = scmp.eq.s32.totalorder %s18, 0
      %p129 = por %p127, %p128
      %p130 = scmp.le.s32.totalorder 1, %s12
      %p131 = scmp.lt.s32.totalorder %s12, 3
      %p132 = pnand %p130, %p131
      %p133 = pneg %p132
      // Predicated region
      $region9: #{tpu_custom_call.1} parent=5 // pred_check
        _
      $region10: #{tpu_custom_call.1} parent=5 // pred_check_branch
        %135 = sbr.rel (%p132) target = $region12
      $region11: #{tpu_custom_call.1} parent=5 // pred_region
        %s136 = ssub.s32 %s12, 1
        // Predicated region
        $region13: #{tpu_custom_call.1} parent=11 // pred_check
          %p137 = pneg %p73
        $region14: #{tpu_custom_call.1} parent=11 // pred_check_branch
          %139 = sbr.rel (%p137) target = $region16
        $region15: #{tpu_custom_call.1} parent=11 // pred_region
          _
        $region16: #{tpu_custom_call.1} parent=11 // pred_fallthru
          _
        // Predicated region
        $region17: #{tpu_custom_call.1} parent=11 // pred_check
          %p140 = pneg %p94
        $region18: #{tpu_custom_call.1} parent=11 // pred_check_branch
          %142 = sbr.rel (%p140) target = $region20
        $region19: #{tpu_custom_call.1} parent=11 // pred_region
          _
        $region20: #{tpu_custom_call.1} parent=11 // pred_fallthru
          _
      $region12: #{tpu_custom_call.1} parent=5 // pred_fallthru
        _
      %p143 = scmp.lt.s32.totalorder %s12, 2
      // Predicated region
      $region21: #{tpu_custom_call.1} parent=5 // pred_check
        %p144 = pneg %p143
      $region22: #{tpu_custom_call.1} parent=5 // pred_check_branch
        %146 = sbr.rel (%p144) target = $region24
      $region23: #{tpu_custom_call.1} parent=5 // pred_region
        // Predicated region
        $region25: #{tpu_custom_call.1} parent=23 // pred_check
          %p147 = pneg %p46
        $region26: #{tpu_custom_call.1} parent=23 // pred_check_branch
          %149 = sbr.rel (%p147) target = $region28
        $region27: #{tpu_custom_call.1} parent=23 // pred_region
          %s150 = smul.u32 2, %s20
          %p151 = scmp.lt.s32.totalorder %s19, 1
          %s152 = scalar_select %p151, %s19, 1
          %p153 = scmp.lt.s32.totalorder %s150, 1
          %s154 = scalar_select %p153, %s150, 1
          %s155 = smul.addr %s152, 2
          %s156 = sadd.s32 %s154, %s155
          %s157 = smul.addr %s156, 8
          %s158 = scalar_lea.vmem %s0, %s157
          %s159 = smul.u32 2, %s20
        $region28: #{tpu_custom_call.1} parent=23 // pred_fallthru
          _
      $region24: #{tpu_custom_call.1} parent=5 // pred_fallthru
        _
      %p160 = scmp.le.s32.totalorder 1, %s12
      %p161 = scmp.lt.s32.totalorder %s12, 3
      %p162 = pnand %p160, %p161
      %p163 = pneg %p162
      // Predicated region
      $region29: #{tpu_custom_call.1} parent=5 // pred_check
        _
      $region30: #{tpu_custom_call.1} parent=5 // pred_check_branch
        %165 = sbr.rel (%p162) target = $region32
      $region31: #{tpu_custom_call.1} parent=5 // pred_region
        %s166 = ssub.s32 %s12, 1
        %s167 = smul.u32 2, %s22
        %p168 = scmp.lt.s32.totalorder %s21, 1
        %s169 = scalar_select %p168, %s21, 1
        %p170 = scmp.lt.s32.totalorder %s167, 1
        %s171 = scalar_select %p170, %s167, 1
        %s172 = smul.addr %s169, 2
        %s173 = sadd.s32 %s171, %s172
        %s174 = smul.addr %s173, 8
        %s175 = scalar_lea.vmem %s0, %s174
        %p176 = pneg %p52
        %p177 = pneg %p49
        %p178 = pneg %p73
        %p179 = pneg %p70
        %p180 = pneg %p94
        %p181 = pneg %p91
        %p182 = pneg %p122
        %p183 = pneg %p119
        %s184 = sand.u32 %s109, 1
        %s185 = scalar_lea.sflag [#allocation3], %s184
        %s186 = sand.u32 %s109, 1
        %s187 = smul.addr %s186, 48
        %s188 = scalar_lea.vmem [#allocation2], %s187
        %s189 = smul.u32 2, %s22
        %p190 = scmp.lt.s32.totalorder %s21, 1
        %s191 = scalar_select %p190, %s21, 1
        %p192 = scmp.lt.s32.totalorder %s189, 1
        %s193 = scalar_select %p192, %s189, 1
        %s194 = smul.addr %s191, 2
        %s195 = sadd.s32 %s193, %s194
        %s196 = smul.addr %s195, 8
        %s197 = scalar_lea.vmem %s0, %s196
        %s198 = smul.u32 2, %s22
        %s199 = smul.u32 2, %s22
        %v200 = vld [vmem:[%s1] sm:$0xff]
        %v201 = vld [vmem:[%s1 + $0x8] sm:$0xff]
        %v202 = vld [vmem:[%s1 + $0x10] sm:$0xff]
        %v203 = vld [vmem:[%s197] sm:$0xff]
        %v204 = vld [vmem:[%s197 + $0x8] sm:$0xff]
        %v205 = vld [vmem:[%s2] sm:$0xff]
        %v206 = vld [vmem:[%s2 + $0x8] sm:$0xff]
        %v207 = vld [vmem:[%s2 + $0x10] sm:$0xff]
        %209 = vset.pattern.permute.xlu0 0
        %210 = vperm.xlu0 %209, %v205
        %v211 = vpop.permute.xlu0 %210
        %214 = vset.pattern.permute.xlu0 0
        %215 = vperm.xlu0 %214, %v206
        %v216 = vpop.permute.xlu0 %215
        %219 = vset.pattern.permute.xlu0 0
        %220 = vperm.xlu0 %219, %v207
        %v221 = vpop.permute.xlu0 %220
        %vm223 = vcmask 64512
        %v225 = vsel %vm223, %v200, 0
        %v228 = vsel %vm223, %v201, 0
        %v231 = vsel %vm223, %v202, 0
        %233 = vmatprep.subr.mxu0 0.0
        %234 = vmatpush1.msra.mxu0 0.0
        %235 = vmatprep.subr.mxu0 0.0
        %236 = vmatpush1.msra.mxu0 0.0
        %237 = vmatprep.subr.mxu0 0.0
        %238 = vmatpush1.msra.mxu0 0.0
        %239 = vmatprep.subr.mxu0 0.0
        %240 = vmatpush1.msra.mxu0 0.0
        %241 = vmatprep.subr.mxu0 0.0
        %242 = vmatpush1.msra.mxu0 0.0
        %243 = vmatprep.subr.mxu0 0.0
        %244 = vmatpush1.msra.mxu0 0.0
        %245 = vmatprep.subr.mxu0 0.0
        %246 = vmatpush1.msra.mxu0 0.0
        %247 = vmatprep.subr.mxu0 0.0
        %248 = vmatpush1.msra.mxu0 0.0
        %249 = vmatprep.subr.mxu0 0.0
        %250 = vmatpush1.msra.mxu0 0.0
        %251 = vmatprep.subr.mxu0 0.0
        %252 = vmatpush1.msra.mxu0 0.0
        %253 = vmatprep.subr.mxu0 0.0
        %254 = vmatpush1.msra.mxu0 0.0
        %255 = vmatprep.subr.mxu0 0.0
        %256 = vmatpush1.msra.mxu0 0.0
        %257 = vmatprep.subr.mxu0 0.0
        %258 = vmatpush1.msra.mxu0 0.0
        %259 = vmatprep.subr.mxu0 0.0
        %260 = vmatpush1.msra.mxu0 0.0
        %261 = vmatprep.subr.mxu0 0.0
        %262 = vmatpush1.msra.mxu0 0.0
        %263 = vmatprep.subr.mxu0 %v204
        %264 = vmatpush1.msra.mxu0 %v203
        %265 = vmatprep.subr.mxu0 0.0
        %266 = vmatpush2.msra.mxu0 0.0
        %267 = vmatprep.subr.mxu0 0.0
        %268 = vmatpush2.msra.mxu0 0.0
        %269 = vmatprep.subr.mxu0 0.0
        %270 = vmatpush2.msra.mxu0 0.0
        %271 = vmatprep.subr.mxu0 0.0
        %272 = vmatpush2.msra.mxu0 0.0
        %273 = vmatprep.subr.mxu0 0.0
        %274 = vmatpush2.msra.mxu0 0.0
        %275 = vmatprep.subr.mxu0 0.0
        %276 = vmatpush2.msra.mxu0 0.0
        %277 = vmatprep.subr.mxu0 0.0
        %278 = vmatpush2.msra.mxu0 0.0
        %279 = vmatprep.subr.mxu0 0.0
        %280 = vmatpush2.msra.mxu0 0.0
        %281 = vmatprep.subr.mxu0 0.0
        %282 = vmatpush2.msra.mxu0 0.0
        %283 = vmatprep.subr.mxu0 0.0
        %284 = vmatpush2.msra.mxu0 0.0
        %285 = vmatprep.subr.mxu0 0.0
        %286 = vmatpush2.msra.mxu0 0.0
        %287 = vmatprep.subr.mxu0 0.0
        %288 = vmatpush2.msra.mxu0 0.0
        %289 = vmatprep.subr.mxu0 0.0
        %290 = vmatpush2.msra.mxu0 0.0
        %291 = vmatprep.subr.mxu0 0.0
        %292 = vmatpush2.msra.mxu0 0.0
        %293 = vmatprep.subr.mxu0 0.0
        %294 = vmatpush2.msra.mxu0 0.0
        %295 = vmatprep.subr.mxu0 0.0
        %296 = vmatpush2.msra.mxu0 0.0
        %297 = vmatprep.mubr.f32.mxu0 0.0
        %298 = vmatmul.mubr.f32.gmra.mxu0 %v225
        %v299 = vpop.f32.mrf.mxu0
        %v300 = vadd.f32 %v211, %v299
        %v301 = vpop.f32.mrf.mxu0
        %v302 = vadd.f32 %v211, %v301
        %303 = vmatprep.mubr.f32.mxu0 0.0
        %304 = vmatmul.mubr.f32.gmra.mxu0 %v228
        %v305 = vpop.f32.mrf.mxu0
        %v306 = vadd.f32 %v216, %v305
        %v307 = vpop.f32.mrf.mxu0
        %v308 = vadd.f32 %v216, %v307
        %309 = vmatprep.mubr.f32.mxu0 0.0
        %310 = vmatmul.mubr.f32.gmra.mxu0 %v231
        %v311 = vpop.f32.mrf.mxu0
        %v312 = vadd.f32 %v221, %v311
        %v313 = vpop.f32.mrf.mxu0
        %v314 = vadd.f32 %v221, %v313
        %315 = vdwg.mxu0
        %316 = vst [vmem:[%s188] sm:$0xff] %v300
        %317 = vst [vmem:[%s188 + $0x8] sm:$0xff] %v302
        %318 = vst [vmem:[%s188 + $0x10] sm:$0xff] %v306
        %319 = vst [vmem:[%s188 + $0x18] sm:$0xff] %v308
        %320 = vst [vmem:[%s188 + $0x20] sm:$0xff] %v312
        %321 = vst [vmem:[%s188 + $0x28] sm:$0xff] %v314
        %s322 = sand.u32 %s109, 1
        %s323 = scalar_lea.sflag [#allocation3], %s322
        %s324 = sand.u32 %s109, 1
        %s325 = smul.addr %s324, 48
        %s326 = scalar_lea.vmem [#allocation2], %s325
        // Predicated region
        $region33: #{tpu_custom_call.1} parent=31 // pred_check
          %p327 = pneg %p119
        $region34: #{tpu_custom_call.1} parent=31 // pred_check_branch
          %329 = sbr.rel (%p327) target = $region36
        $region35: #{tpu_custom_call.1} parent=31 // pred_region
          %s330 = smul.u32 2, %s22
          %s332 = ssub.s32 768, 768
          %333 = vsyncadd %s323, %s332
          %s334 = smul.addr %s21, 6
          %s335 = sadd.s32 %s330, %s334
          %s336 = smul.addr %s335, 128
          %s337 = scalar_lea.hbm %s3, %s336
          %s338 = sshll.u32 %s326, 4
          %s339 = int_to_ptr.vmem [resolvable:$true] %s338
          %344 = dma.vmem_to_hbm [thread:$0]  %s339, 768, %s337, %s323, 256, 256, 16
        $region36: #{tpu_custom_call.1} parent=31 // pred_fallthru
          _
      $region32: #{tpu_custom_call.1} parent=5 // pred_fallthru
        _
      %p345 = scmp.le.s32.totalorder 2, %s12
      // Predicated region
      $region37: #{tpu_custom_call.1} parent=5 // pred_check
        %p346 = pneg %p345
      $region38: #{tpu_custom_call.1} parent=5 // pred_check_branch
        %348 = sbr.rel (%p346) target = $region40
      $region39: #{tpu_custom_call.1} parent=5 // pred_region
        %s349 = ssub.s32 %s12, 2
        // Predicated region
        $region41: #{tpu_custom_call.1} parent=39 // pred_check
          %p350 = pneg %p125
        $region42: #{tpu_custom_call.1} parent=39 // pred_check_branch
          %352 = sbr.rel (%p350) target = $region44
        $region43: #{tpu_custom_call.1} parent=39 // pred_region
          %s353 = sand.u32 %s110, 1
          %s354 = scalar_lea.sflag [#allocation3], %s353
          %s355 = sand.u32 %s110, 1
          %s356 = smul.addr %s355, 48
          %s357 = scalar_lea.vmem [#allocation2], %s356
          %358 = dma.done %s354, 768
        $region44: #{tpu_custom_call.1} parent=39 // pred_fallthru
          _
      $region40: #{tpu_custom_call.1} parent=5 // pred_fallthru
        _
    $region6: #{tpu_custom_call.1} parent=1 // loop_footer
      %s16 = sadd.s32 1, %s12
    $region7: #{tpu_custom_call.1} parent=1 // loop_footer_branch
      %11 = sbr.rel target = $region3
    $region8: #{tpu_custom_call.1} parent=1 // loop_exit
      _
    %359 = vsyncpa [#allocation3], 1
    %s360 = scalar_lea.sflag [#allocation3], 1
    %361 = vsyncpa %s360, 1

</llo_original>
